<compile_context>
chip_gen: v6e
topology: v6e:2x2x1
jax: 0.10.0
libtpu: 0.0.40
codegen_flags: <defaults>
</compile_context>

<pallas_src>
import math
import numpy as np

import jax
import jax.numpy as jnp
from jax import lax
from jax.experimental import pallas as pl
from jax.experimental.pallas import tpu as pltpu


# ----------------------------------------------------------------------------
# Buffer construction (deterministic, mirrors the PyTorch __init__)
# ----------------------------------------------------------------------------
def get_ml_array(deg_view):
    ml_list = []
    for i in range(deg_view):
        l = 2 ** i
        for m in range(l + 1):
            ml_list.append((m, l))
    return np.array(ml_list).T  # [2, C]  row0 = m, row1 = l


def generalized_binomial_coeff(a, k):
    return np.prod(a - np.arange(k)) / math.factorial(k)


def assoc_legendre_coeff(l, m, k):
    return ((-1) ** m * 2 ** l * math.factorial(l) / math.factorial(k)
            / math.factorial(l - k - m)
            * generalized_binomial_coeff(0.5 * (l + k + m - 1.0), l))


def sph_harm_coeff(l, m, k):
    return (np.sqrt((2.0 * l + 1.0) * math.factorial(l - m)
                    / (4.0 * np.pi * math.factorial(l + m)))
            * assoc_legendre_coeff(l, m, k))


def build_ide_buffers(deg_view=4):
    if deg_view > 5:
        raise ValueError("Only deg_view of at most 5 is numerically stable.")
    ml_array = get_ml_array(deg_view)
    l_max = 2 ** (deg_view - 1)
    mat = np.zeros((l_max + 1, ml_array.shape[1]), dtype=np.float64)
    for i, (m, l) in enumerate(ml_array.T):
        for k in range(l - m + 1):
            mat[k, i] = sph_harm_coeff(l, m, k)
    m_list = [int(m) for m in ml_array[0, :]]
    l_list = [int(l) for l in ml_array[1, :]]
    return mat, m_list, l_list, int(l_max)


# ----------------------------------------------------------------------------
# Pallas kernel: (8,128)-dense chunks, streaming per-channel stores
# ----------------------------------------------------------------------------
def make_ide_kernel(deg_view, num_chunks, c_pad, scalar_kappa):
    mat_np, m_list, l_list, l_max = build_ide_buffers(deg_view)
    C = mat_np.shape[1]
    m_max = max(m_list)
    sigma_by_l = {l: 0.5 * l * (l + 1) for l in sorted(set(l_list))}

    def emit_chunk(x, y, z, scale_by_l, out_ref, j):
        # y = y + (x == 0 and y == 0) -- avoids degenerate azimuth
        zero_xy = jnp.logical_and(x == 0.0, y == 0.0)
        y = y + zero_xy.astype(y.dtype)

        # z^1 .. z^l_max   (z^0 is folded into each polynomial's constant term)
        z_pows = [None, z]
        for _ in range(l_max - 1):
            z_pows.append(z_pows[-1] * z)

        # Re/Im((x + i*y)^p) for p = 1 .. m_max via real recurrence (p=0 special)
        cre = [None, x]
        cim = [None, y]
        for _ in range(m_max - 1):
            pr, pi = cre[-1], cim[-1]
            cre.append(pr * x - pi * y)
            cim.append(pr * y + pi * x)

        zeros = jnp.zeros_like(x)
        odt = out_ref.dtype
        for i in range(C):
            m, l = m_list[i], l_list[i]
            # constant-coefficient Legendre polynomial in z (unrolled FMAs;
            # coefficients are compile-time constants -> no extra operands/DMA)
            zc = None
            for k in range(l_max + 1):
                coef = float(mat_np[k, i])
                if coef != 0.0:
                    term = jnp.full_like(z, coef) if k == 0 else z_pows[k] * coef
                    zc = term if zc is None else zc + term
            if zc is None:
                zc = zeros
            zs = zc * scale_by_l[l]
            re_v = zs if m == 0 else cre[m] * zs
            im_v = zeros if m == 0 else cim[m] * zs
            # streaming per-channel stores -> small live set, no concat/relayout
            out_ref[i, j, :, :] = re_v.astype(odt)
            out_ref[C + i, j, :, :] = im_v.astype(odt)
        # zero the padded channels (sliced off in the wrapper)
        for c in range(2 * C, c_pad):
            out_ref[c, j, :, :] = zeros.astype(odt)

    # TODO(synk): the PyTorch forward raises on NaN; NaNs pass through here.
    if scalar_kappa:
        def ide_kernel(xyz_ref, kap_ref, out_ref):
            # scalar roughness: one attenuation set per grid step (loop-invariant)
            kb = jnp.full((8, 128), kap_ref[0, 0], jnp.float32)
            scale_by_l = {l: jnp.exp(kb * (-s)) for l, s in sigma_by_l.items()}

            def body(j, carry):
                x = xyz_ref[0, j, :, :]
                y = xyz_ref[1, j, :, :]
                z = xyz_ref[2, j, :, :]
                emit_chunk(x, y, z, scale_by_l, out_ref, j)
                return carry

            lax.fori_loop(0, num_chunks, body, 0)
    else:
        def ide_kernel(xyz_ref, kap_ref, out_ref):
            def body(j, carry):
                x = xyz_ref[0, j, :, :]
                y = xyz_ref[1, j, :, :]
                z = xyz_ref[2, j, :, :]
                kappa = kap_ref[j, :, :]
                # direct exp per level: runs on the EUP slot, no underflow
                scale_by_l = {l: jnp.exp(kappa * (-s))
                              for l, s in sigma_by_l.items()}
                emit_chunk(x, y, z, scale_by_l, out_ref, j)
                return carry

            lax.fori_loop(0, num_chunks, body, 0)

    return ide_kernel, C


# ----------------------------------------------------------------------------
# Wrapper
# ----------------------------------------------------------------------------
def integrated_dir_encoding(xyz, roughness=0.0, *, deg_view=4, tile_points=8192,
                            out_dtype=jnp.float32, channel_first=False):
    """xyz: [..., 3]; roughness: scalar or broadcastable to [..., 1] (kappa_inv).
    Returns [..., 2*C] (or [2*C, ...] if channel_first) with
    C = 2**deg_view - 1 + deg_view."""
    lead_shape = xyz.shape[:-1]
    N = int(np.prod(lead_shape)) if lead_shape else 1

    # --- tiling: 1024-pt (8,128) chunks; big tiles amortize grid-step overhead;
    #     keep >= 2 grid steps when possible so both v7x TensorCores get work.
    SUB = 8 * 128
    n_sub = max(1, -(-N // SUB))
    max_chunks = max(1, int(tile_points) // SUB)
    if n_sub >= 2:
        grid_n = max(2, -(-n_sub // max_chunks))
        chunks_per_tile = -(-n_sub // grid_n)
    else:
        grid_n, chunks_per_tile = 1, 1
    n_chunks_pad = grid_n * chunks_per_tile
    n_pad = n_chunks_pad * SUB

    # --- output channel padding to a multiple of 8 sublanes (38 -> 40)
    C = 2 ** deg_view - 1 + deg_view
    out_dim = 2 * C
    c_pad = -(-out_dim // 8) * 8

    # --- scalar-roughness fast path (common Ref-NeRF call uses roughness=0.0)
    scalar_kappa = isinstance(roughness, (int, float)) or (
        hasattr(roughness, "ndim") and roughness.ndim == 0)

    kernel, C_k = make_ide_kernel(deg_view, chunks_per_tile, c_pad, scalar_kappa)
    assert C_k == C

    # --- planar, chunked inputs
    xyz_flat = jnp.reshape(xyz, (N, 3)).astype(jnp.float32)
    if n_pad != N:
        xyz_flat = jnp.pad(xyz_flat, ((0, n_pad - N), (0, 0)))
    xyz_cf = xyz_flat.T.reshape(3, n_chunks_pad, 8, 128)

    if scalar_kappa:
        kap_in = jnp.full((1, 1), roughness, jnp.float32)
        kap_spec = pl.BlockSpec(memory_space=pltpu.MemorySpace.SMEM)
    else:
        kap = jnp.broadcast_to(jnp.asarray(roughness, jnp.float32),
                               lead_shape + (1,)).reshape(N)
        if n_pad != N:
            kap = jnp.pad(kap, (0, n_pad - N))
        kap_in = kap.reshape(n_chunks_pad, 8, 128)
        kap_spec = pl.BlockSpec((chunks_per_tile, 8, 128), lambda i: (i, 0, 0))

    out_cf = pl.pallas_call(
        kernel,
        out_shape=jax.ShapeDtypeStruct((c_pad, n_chunks_pad, 8, 128), out_dtype),
        grid_spec=pltpu.PrefetchScalarGridSpec(
            num_scalar_prefetch=0,
            grid=(grid_n,),
            in_specs=[
                pl.BlockSpec((3, chunks_per_tile, 8, 128),
                             lambda i: (0, i, 0, 0)),
                kap_spec,
            ],
            out_specs=pl.BlockSpec((c_pad, chunks_per_tile, 8, 128),
                                   lambda i: (0, i, 0, 0)),
        ),
        compiler_params=pltpu.CompilerParams(
            dimension_semantics=("parallel",)),
    )(xyz_cf, kap_in)

    out_cf = out_cf[:out_dim]                    # drop padded channels
    if channel_first:
        # consumers that accept channel-first skip the transpose entirely;
        # padded points are sliced off on the point axis.
        out = out_cf.reshape(out_dim, n_pad)[:, :N]
        return out.reshape((out_dim,) + lead_shape)
    out = jnp.transpose(out_cf, (1, 2, 3, 0)).reshape(n_pad, out_dim)[:N]
    return out.reshape(lead_shape + (out_dim,))


# ----------------------------------------------------------------------------
# Pure-JAX reference (mirrors PyTorch forward semantics) for verification
# ----------------------------------------------------------------------------
def ide_reference(xyz, roughness, deg_view=4):
    mat_np, m_list, l_list, l_max = build_ide_buffers(deg_view)
    mat = jnp.asarray(mat_np, jnp.float32)
    sigma = jnp.asarray([0.5 * l * (l + 1) for l in l_list], jnp.float32)
    x = xyz[..., 0:1].astype(jnp.float32)
    y = xyz[..., 1:2].astype(jnp.float32)
    z = xyz[..., 2:3].astype(jnp.float32)
    zero_xy = jnp.logical_and(x == 0.0, y == 0.0)
    y = y + zero_xy.astype(y.dtype)
    vmz = jnp.concatenate([z ** p for p in range(l_max + 1)], axis=-1)
    xy = (x + 1j * y).astype(jnp.complex64)
    vmxy = jnp.concatenate([xy ** m for m in m_list], axis=-1)
    sph = vmxy * jnp.matmul(vmz, mat)
    ide = sph * jnp.exp(-sigma * roughness)
    return jnp.concatenate([jnp.real(ide), jnp.imag(ide)], axis=-1)


# ----------------------------------------------------------------------------
if __name__ == "__main__":
    key = jax.random.PRNGKey(0)
    k1, k2, k3 = jax.random.split(key, 3)

    # Test 1: small shapes, per-point roughness (matches the module's forward).
    batch, num = 2, 64
    xyz = jax.random.normal(k1, (batch, num, 3), dtype=jnp.float32)
    xyz = xyz / jnp.linalg.norm(xyz, axis=-1, keepdims=True)   # unit directions
    roughness = jax.random.uniform(k2, (batch, num, 1), dtype=jnp.float32)

    out = jax.block_until_ready(
        integrated_dir_encoding(xyz, roughness, deg_view=4))
    ref = ide_reference(xyz, roughness, deg_view=4)
    assert out.shape == (batch, num, 38), out.shape
    np.testing.assert_allclose(np.asarray(out), np.asarray(ref),
                               rtol=1e-4, atol=1e-4)

    # Test 2: scalar-roughness SMEM fast path + multi-chunk, multi-step grid
    # (exercises the in-kernel fori_loop and the 2-step grid).
    xyz2 = jax.random.normal(k3, (2, 2048, 3), dtype=jnp.float32)
    xyz2 = xyz2 / jnp.linalg.norm(xyz2, axis=-1, keepdims=True)
    out2 = jax.block_until_ready(
        integrated_dir_encoding(xyz2, 0.1, deg_view=4, tile_points=2048))
    ref2 = ide_reference(xyz2, 0.1, deg_view=4)
    assert out2.shape == (2, 2048, 38), out2.shape
    np.testing.assert_allclose(np.asarray(out2), np.asarray(ref2),
                               rtol=1e-4, atol=2e-4)

    print("KERNEL_OK")
</pallas_src>

<mosaic_0001>
module attributes {stable_mosaic.version = 11 : i64} {
  func.func @ide_kernel(%arg0: i32, %arg1: memref<3x1x8x128xf32, #tpu.memory_space<vmem>>, %arg2: memref<1x8x128xf32, #tpu.memory_space<vmem>>, %arg3: memref<40x1x8x128xf32, #tpu.memory_space<vmem>>) attributes {dimension_semantics = [#tpu.dimension_semantics<parallel>], iteration_bounds = array<i64: 1>, scalar_prefetch = 0 : i64, scratch_operands = 0 : i64, tpu.core_type = #tpu.core_type<tc>, window_params = [{transform_indices = @transform_0, window_bounds = array<i64: 3, 1, 8, 128>}, {transform_indices = @transform_1, window_bounds = array<i64: 1, 8, 128>}, {transform_indices = @transform_2, window_bounds = array<i64: 40, 1, 8, 128>}]} {
    %c0_i32 = arith.constant 0 : i32
    %c0 = arith.constant 0 : index
    %0 = arith.index_cast %c0_i32 : i32 to index
    %c0_0 = arith.constant 0 : index
    %c0_1 = arith.constant 0 : index
    %1 = vector.load %arg1[%c0, %0, %c0_0, %c0_1] : memref<3x1x8x128xf32, #tpu.memory_space<vmem>>, vector<1x1x8x128xf32>
    %2 = vector.shape_cast %1 : vector<1x1x8x128xf32> to vector<8x128xf32>
    %c1 = arith.constant 1 : index
    %3 = arith.index_cast %c0_i32 : i32 to index
    %c0_2 = arith.constant 0 : index
    %c0_3 = arith.constant 0 : index
    %4 = vector.load %arg1[%c1, %3, %c0_2, %c0_3] : memref<3x1x8x128xf32, #tpu.memory_space<vmem>>, vector<1x1x8x128xf32>
    %5 = vector.shape_cast %4 : vector<1x1x8x128xf32> to vector<8x128xf32>
    %c2 = arith.constant 2 : index
    %6 = arith.index_cast %c0_i32 : i32 to index
    %c0_4 = arith.constant 0 : index
    %c0_5 = arith.constant 0 : index
    %7 = vector.load %arg1[%c2, %6, %c0_4, %c0_5] : memref<3x1x8x128xf32, #tpu.memory_space<vmem>>, vector<1x1x8x128xf32>
    %8 = vector.shape_cast %7 : vector<1x1x8x128xf32> to vector<8x128xf32>
    %9 = arith.index_cast %c0_i32 : i32 to index
    %c0_6 = arith.constant 0 : index
    %c0_7 = arith.constant 0 : index
    %10 = vector.load %arg2[%9, %c0_6, %c0_7] : memref<1x8x128xf32, #tpu.memory_space<vmem>>, vector<1x8x128xf32>
    %11 = vector.shape_cast %10 : vector<1x8x128xf32> to vector<8x128xf32>
    %cst = arith.constant -1.000000e+00 : f32
    %12 = vector.broadcast %cst : f32 to vector<8x128xf32>
    %13 = arith.mulf %11, %12 : vector<8x128xf32>
    %14 = math.exp %13 : vector<8x128xf32>
    %cst_8 = arith.constant -3.000000e+00 : f32
    %15 = vector.broadcast %cst_8 : f32 to vector<8x128xf32>
    %16 = arith.mulf %11, %15 : vector<8x128xf32>
    %17 = math.exp %16 : vector<8x128xf32>
    %cst_9 = arith.constant -1.000000e+01 : f32
    %18 = vector.broadcast %cst_9 : f32 to vector<8x128xf32>
    %19 = arith.mulf %11, %18 : vector<8x128xf32>
    %20 = math.exp %19 : vector<8x128xf32>
    %cst_10 = arith.constant -3.600000e+01 : f32
    %21 = vector.broadcast %cst_10 : f32 to vector<8x128xf32>
    %22 = arith.mulf %11, %21 : vector<8x128xf32>
    %23 = math.exp %22 : vector<8x128xf32>
    %cst_11 = arith.constant 0.000000e+00 : f32
    %24 = vector.broadcast %cst_11 : f32 to vector<8x128xf32>
    %25 = arith.cmpf oeq, %2, %24 : vector<8x128xf32>
    %cst_12 = arith.constant 0.000000e+00 : f32
    %26 = vector.broadcast %cst_12 : f32 to vector<8x128xf32>
    %27 = arith.cmpf oeq, %5, %26 : vector<8x128xf32>
    %28 = arith.andi %25, %27 : vector<8x128xi1>
    %29 = arith.extui %28 : vector<8x128xi1> to vector<8x128xi32>
    %30 = arith.sitofp %29 : vector<8x128xi32> to vector<8x128xf32>
    %31 = arith.addf %5, %30 : vector<8x128xf32>
    %32 = arith.mulf %8, %8 : vector<8x128xf32>
    %33 = arith.mulf %32, %8 : vector<8x128xf32>
    %34 = arith.mulf %33, %8 : vector<8x128xf32>
    %35 = arith.mulf %34, %8 : vector<8x128xf32>
    %36 = arith.mulf %35, %8 : vector<8x128xf32>
    %37 = arith.mulf %36, %8 : vector<8x128xf32>
    %38 = arith.mulf %37, %8 : vector<8x128xf32>
    %39 = arith.mulf %2, %2 : vector<8x128xf32>
    %40 = arith.mulf %31, %31 : vector<8x128xf32>
    %41 = arith.subf %39, %40 : vector<8x128xf32>
    %42 = arith.mulf %2, %31 : vector<8x128xf32>
    %43 = arith.mulf %31, %2 : vector<8x128xf32>
    %44 = arith.addf %42, %43 : vector<8x128xf32>
    %45 = arith.mulf %41, %2 : vector<8x128xf32>
    %46 = arith.mulf %44, %31 : vector<8x128xf32>
    %47 = arith.subf %45, %46 : vector<8x128xf32>
    %48 = arith.mulf %41, %31 : vector<8x128xf32>
    %49 = arith.mulf %44, %2 : vector<8x128xf32>
    %50 = arith.addf %48, %49 : vector<8x128xf32>
    %51 = arith.mulf %47, %2 : vector<8x128xf32>
    %52 = arith.mulf %50, %31 : vector<8x128xf32>
    %53 = arith.subf %51, %52 : vector<8x128xf32>
    %54 = arith.mulf %47, %31 : vector<8x128xf32>
    %55 = arith.mulf %50, %2 : vector<8x128xf32>
    %56 = arith.addf %54, %55 : vector<8x128xf32>
    %57 = arith.mulf %53, %2 : vector<8x128xf32>
    %58 = arith.mulf %56, %31 : vector<8x128xf32>
    %59 = arith.subf %57, %58 : vector<8x128xf32>
    %60 = arith.mulf %53, %31 : vector<8x128xf32>
    %61 = arith.mulf %56, %2 : vector<8x128xf32>
    %62 = arith.addf %60, %61 : vector<8x128xf32>
    %63 = arith.mulf %59, %2 : vector<8x128xf32>
    %64 = arith.mulf %62, %31 : vector<8x128xf32>
    %65 = arith.subf %63, %64 : vector<8x128xf32>
    %66 = arith.mulf %59, %31 : vector<8x128xf32>
    %67 = arith.mulf %62, %2 : vector<8x128xf32>
    %68 = arith.addf %66, %67 : vector<8x128xf32>
    %69 = arith.mulf %65, %2 : vector<8x128xf32>
    %70 = arith.mulf %68, %31 : vector<8x128xf32>
    %71 = arith.subf %69, %70 : vector<8x128xf32>
    %72 = arith.mulf %65, %31 : vector<8x128xf32>
    %73 = arith.mulf %68, %2 : vector<8x128xf32>
    %74 = arith.addf %72, %73 : vector<8x128xf32>
    %75 = arith.mulf %71, %2 : vector<8x128xf32>
    %76 = arith.mulf %74, %31 : vector<8x128xf32>
    %77 = arith.subf %75, %76 : vector<8x128xf32>
    %78 = arith.mulf %71, %31 : vector<8x128xf32>
    %79 = arith.mulf %74, %2 : vector<8x128xf32>
    %80 = arith.addf %78, %79 : vector<8x128xf32>
    %cst_13 = arith.constant 0.000000e+00 : f32
    %81 = vector.broadcast %cst_13 : f32 to vector<8x128xf32>
    %cst_14 = arith.constant 0.488602519 : f32
    %82 = vector.broadcast %cst_14 : f32 to vector<8x128xf32>
    %83 = arith.mulf %8, %82 : vector<8x128xf32>
    %84 = arith.mulf %83, %14 : vector<8x128xf32>
    %c0_15 = arith.constant 0 : index
    %85 = arith.index_cast %c0_i32 : i32 to index
    %c0_16 = arith.constant 0 : index
    %c0_17 = arith.constant 0 : index
    %86 = vector.load %arg3[%c0_15, %85, %c0_16, %c0_17] : memref<40x1x8x128xf32, #tpu.memory_space<vmem>>, vector<1x1x8x128xf32>
    %87 = vector.shape_cast %86 : vector<1x1x8x128xf32> to vector<8x128xf32>
    %88 = vector.shape_cast %84 : vector<8x128xf32> to vector<1x1x8x128xf32>
    tpu.vector_store %arg3[%c0_15, %85, %c0_16, %c0_17], %88 {strides = array<i32>} : memref<40x1x8x128xf32, #tpu.memory_space<vmem>>, vector<1x1x8x128xf32>,
    %c19 = arith.constant 19 : index
    %89 = arith.index_cast %c0_i32 : i32 to index
    %c0_18 = arith.constant 0 : index
    %c0_19 = arith.constant 0 : index
    %90 = vector.load %arg3[%c19, %89, %c0_18, %c0_19] : memref<40x1x8x128xf32, #tpu.memory_space<vmem>>, vector<1x1x8x128xf32>
    %91 = vector.shape_cast %90 : vector<1x1x8x128xf32> to vector<8x128xf32>
    %92 = vector.shape_cast %81 : vector<8x128xf32> to vector<1x1x8x128xf32>
    tpu.vector_store %arg3[%c19, %89, %c0_18, %c0_19], %92 {strides = array<i32>} : memref<40x1x8x128xf32, #tpu.memory_space<vmem>>, vector<1x1x8x128xf32>,
    %cst_20 = arith.constant -0.345494151 : f32
    %93 = vector.broadcast %cst_20 : f32 to vector<8x128xf32>
    %94 = arith.mulf %93, %14 : vector<8x128xf32>
    %95 = arith.mulf %2, %94 : vector<8x128xf32>
    %96 = arith.mulf %31, %94 : vector<8x128xf32>
    %c1_21 = arith.constant 1 : index
    %97 = arith.index_cast %c0_i32 : i32 to index
    %c0_22 = arith.constant 0 : index
    %c0_23 = arith.constant 0 : index
    %98 = vector.load %arg3[%c1_21, %97, %c0_22, %c0_23] : memref<40x1x8x128xf32, #tpu.memory_space<vmem>>, vector<1x1x8x128xf32>
    %99 = vector.shape_cast %98 : vector<1x1x8x128xf32> to vector<8x128xf32>
    %100 = vector.shape_cast %95 : vector<8x128xf32> to vector<1x1x8x128xf32>
    tpu.vector_store %arg3[%c1_21, %97, %c0_22, %c0_23], %100 {strides = array<i32>} : memref<40x1x8x128xf32, #tpu.memory_space<vmem>>, vector<1x1x8x128xf32>,
    %c20 = arith.constant 20 : index
    %101 = arith.index_cast %c0_i32 : i32 to index
    %c0_24 = arith.constant 0 : index
    %c0_25 = arith.constant 0 : index
    %102 = vector.load %arg3[%c20, %101, %c0_24, %c0_25] : memref<40x1x8x128xf32, #tpu.memory_space<vmem>>, vector<1x1x8x128xf32>
    %103 = vector.shape_cast %102 : vector<1x1x8x128xf32> to vector<8x128xf32>
    %104 = vector.shape_cast %96 : vector<8x128xf32> to vector<1x1x8x128xf32>
    tpu.vector_store %arg3[%c20, %101, %c0_24, %c0_25], %104 {strides = array<i32>} : memref<40x1x8x128xf32, #tpu.memory_space<vmem>>, vector<1x1x8x128xf32>,
    %cst_26 = arith.constant -0.31539157 : f32
    %105 = vector.broadcast %cst_26 : f32 to vector<8x128xf32>
    %cst_27 = arith.constant 0.946174681 : f32
    %106 = vector.broadcast %cst_27 : f32 to vector<8x128xf32>
    %107 = arith.mulf %32, %106 : vector<8x128xf32>
    %108 = arith.addf %105, %107 : vector<8x128xf32>
    %109 = arith.mulf %108, %17 : vector<8x128xf32>
    %c2_28 = arith.constant 2 : index
    %110 = arith.index_cast %c0_i32 : i32 to index
    %c0_29 = arith.constant 0 : index
    %c0_30 = arith.constant 0 : index
    %111 = vector.load %arg3[%c2_28, %110, %c0_29, %c0_30] : memref<40x1x8x128xf32, #tpu.memory_space<vmem>>, vector<1x1x8x128xf32>
    %112 = vector.shape_cast %111 : vector<1x1x8x128xf32> to vector<8x128xf32>
    %113 = vector.shape_cast %109 : vector<8x128xf32> to vector<1x1x8x128xf32>
    tpu.vector_store %arg3[%c2_28, %110, %c0_29, %c0_30], %113 {strides = array<i32>} : memref<40x1x8x128xf32, #tpu.memory_space<vmem>>, vector<1x1x8x128xf32>,
    %c21 = arith.constant 21 : index
    %114 = arith.index_cast %c0_i32 : i32 to index
    %c0_31 = arith.constant 0 : index
    %c0_32 = arith.constant 0 : index
    %115 = vector.load %arg3[%c21, %114, %c0_31, %c0_32] : memref<40x1x8x128xf32, #tpu.memory_space<vmem>>, vector<1x1x8x128xf32>
    %116 = vector.shape_cast %115 : vector<1x1x8x128xf32> to vector<8x128xf32>
    %117 = vector.shape_cast %81 : vector<8x128xf32> to vector<1x1x8x128xf32>
    tpu.vector_store %arg3[%c21, %114, %c0_31, %c0_32], %117 {strides = array<i32>} : memref<40x1x8x128xf32, #tpu.memory_space<vmem>>, vector<1x1x8x128xf32>,
    %cst_33 = arith.constant -0.772548377 : f32
    %118 = vector.broadcast %cst_33 : f32 to vector<8x128xf32>
    %119 = arith.mulf %8, %118 : vector<8x128xf32>
    %120 = arith.mulf %119, %17 : vector<8x128xf32>
    %121 = arith.mulf %2, %120 : vector<8x128xf32>
    %122 = arith.mulf %31, %120 : vector<8x128xf32>
    %c3 = arith.constant 3 : index
    %123 = arith.index_cast %c0_i32 : i32 to index
    %c0_34 = arith.constant 0 : index
    %c0_35 = arith.constant 0 : index
    %124 = vector.load %arg3[%c3, %123, %c0_34, %c0_35] : memref<40x1x8x128xf32, #tpu.memory_space<vmem>>, vector<1x1x8x128xf32>
    %125 = vector.shape_cast %124 : vector<1x1x8x128xf32> to vector<8x128xf32>
    %126 = vector.shape_cast %121 : vector<8x128xf32> to vector<1x1x8x128xf32>
    tpu.vector_store %arg3[%c3, %123, %c0_34, %c0_35], %126 {strides = array<i32>} : memref<40x1x8x128xf32, #tpu.memory_space<vmem>>, vector<1x1x8x128xf32>,
    %c22 = arith.constant 22 : index
    %127 = arith.index_cast %c0_i32 : i32 to index
    %c0_36 = arith.constant 0 : index
    %c0_37 = arith.constant 0 : index
    %128 = vector.load %arg3[%c22, %127, %c0_36, %c0_37] : memref<40x1x8x128xf32, #tpu.memory_space<vmem>>, vector<1x1x8x128xf32>
    %129 = vector.shape_cast %128 : vector<1x1x8x128xf32> to vector<8x128xf32>
    %130 = vector.shape_cast %122 : vector<8x128xf32> to vector<1x1x8x128xf32>
    tpu.vector_store %arg3[%c22, %127, %c0_36, %c0_37], %130 {strides = array<i32>} : memref<40x1x8x128xf32, #tpu.memory_space<vmem>>, vector<1x1x8x128xf32>,
    %cst_38 = arith.constant 0.386274189 : f32
    %131 = vector.broadcast %cst_38 : f32 to vector<8x128xf32>
    %132 = arith.mulf %131, %17 : vector<8x128xf32>
    %133 = arith.mulf %41, %132 : vector<8x128xf32>
    %134 = arith.mulf %44, %132 : vector<8x128xf32>
    %c4 = arith.constant 4 : index
    %135 = arith.index_cast %c0_i32 : i32 to index
    %c0_39 = arith.constant 0 : index
    %c0_40 = arith.constant 0 : index
    %136 = vector.load %arg3[%c4, %135, %c0_39, %c0_40] : memref<40x1x8x128xf32, #tpu.memory_space<vmem>>, vector<1x1x8x128xf32>
    %137 = vector.shape_cast %136 : vector<1x1x8x128xf32> to vector<8x128xf32>
    %138 = vector.shape_cast %133 : vector<8x128xf32> to vector<1x1x8x128xf32>
    tpu.vector_store %arg3[%c4, %135, %c0_39, %c0_40], %138 {strides = array<i32>} : memref<40x1x8x128xf32, #tpu.memory_space<vmem>>, vector<1x1x8x128xf32>,
    %c23 = arith.constant 23 : index
    %139 = arith.index_cast %c0_i32 : i32 to index
    %c0_41 = arith.constant 0 : index
    %c0_42 = arith.constant 0 : index
    %140 = vector.load %arg3[%c23, %139, %c0_41, %c0_42] : memref<40x1x8x128xf32, #tpu.memory_space<vmem>>, vector<1x1x8x128xf32>
    %141 = vector.shape_cast %140 : vector<1x1x8x128xf32> to vector<8x128xf32>
    %142 = vector.shape_cast %134 : vector<8x128xf32> to vector<1x1x8x128xf32>
    tpu.vector_store %arg3[%c23, %139, %c0_41, %c0_42], %142 {strides = array<i32>} : memref<40x1x8x128xf32, #tpu.memory_space<vmem>>, vector<1x1x8x128xf32>,
    %cst_43 = arith.constant 0.317356646 : f32
    %143 = vector.broadcast %cst_43 : f32 to vector<8x128xf32>
    %cst_44 = arith.constant -3.17356634 : f32
    %144 = vector.broadcast %cst_44 : f32 to vector<8x128xf32>
    %145 = arith.mulf %32, %144 : vector<8x128xf32>
    %146 = arith.addf %143, %145 : vector<8x128xf32>
    %cst_45 = arith.constant 3.70249414 : f32
    %147 = vector.broadcast %cst_45 : f32 to vector<8x128xf32>
    %148 = arith.mulf %34, %147 : vector<8x128xf32>
    %149 = arith.addf %146, %148 : vector<8x128xf32>
    %150 = arith.mulf %149, %20 : vector<8x128xf32>
    %c5 = arith.constant 5 : index
    %151 = arith.index_cast %c0_i32 : i32 to index
    %c0_46 = arith.constant 0 : index
    %c0_47 = arith.constant 0 : index
    %152 = vector.load %arg3[%c5, %151, %c0_46, %c0_47] : memref<40x1x8x128xf32, #tpu.memory_space<vmem>>, vector<1x1x8x128xf32>
    %153 = vector.shape_cast %152 : vector<1x1x8x128xf32> to vector<8x128xf32>
    %154 = vector.shape_cast %150 : vector<8x128xf32> to vector<1x1x8x128xf32>
    tpu.vector_store %arg3[%c5, %151, %c0_46, %c0_47], %154 {strides = array<i32>} : memref<40x1x8x128xf32, #tpu.memory_space<vmem>>, vector<1x1x8x128xf32>,
    %c24 = arith.constant 24 : index
    %155 = arith.index_cast %c0_i32 : i32 to index
    %c0_48 = arith.constant 0 : index
    %c0_49 = arith.constant 0 : index
    %156 = vector.load %arg3[%c24, %155, %c0_48, %c0_49] : memref<40x1x8x128xf32, #tpu.memory_space<vmem>>, vector<1x1x8x128xf32>
    %157 = vector.shape_cast %156 : vector<1x1x8x128xf32> to vector<8x128xf32>
    %158 = vector.shape_cast %81 : vector<8x128xf32> to vector<1x1x8x128xf32>
    tpu.vector_store %arg3[%c24, %155, %c0_48, %c0_49], %158 {strides = array<i32>} : memref<40x1x8x128xf32, #tpu.memory_space<vmem>>, vector<1x1x8x128xf32>,
    %cst_50 = arith.constant 1.41926205 : f32
    %159 = vector.broadcast %cst_50 : f32 to vector<8x128xf32>
    %160 = arith.mulf %8, %159 : vector<8x128xf32>
    %cst_51 = arith.constant -3.31161141 : f32
    %161 = vector.broadcast %cst_51 : f32 to vector<8x128xf32>
    %162 = arith.mulf %33, %161 : vector<8x128xf32>
    %163 = arith.addf %160, %162 : vector<8x128xf32>
    %164 = arith.mulf %163, %20 : vector<8x128xf32>
    %165 = arith.mulf %2, %164 : vector<8x128xf32>
    %166 = arith.mulf %31, %164 : vector<8x128xf32>
    %c6 = arith.constant 6 : index
    %167 = arith.index_cast %c0_i32 : i32 to index
    %c0_52 = arith.constant 0 : index
    %c0_53 = arith.constant 0 : index
    %168 = vector.load %arg3[%c6, %167, %c0_52, %c0_53] : memref<40x1x8x128xf32, #tpu.memory_space<vmem>>, vector<1x1x8x128xf32>
    %169 = vector.shape_cast %168 : vector<1x1x8x128xf32> to vector<8x128xf32>
    %170 = vector.shape_cast %165 : vector<8x128xf32> to vector<1x1x8x128xf32>
    tpu.vector_store %arg3[%c6, %167, %c0_52, %c0_53], %170 {strides = array<i32>} : memref<40x1x8x128xf32, #tpu.memory_space<vmem>>, vector<1x1x8x128xf32>,
    %c25 = arith.constant 25 : index
    %171 = arith.index_cast %c0_i32 : i32 to index
    %c0_54 = arith.constant 0 : index
    %c0_55 = arith.constant 0 : index
    %172 = vector.load %arg3[%c25, %171, %c0_54, %c0_55] : memref<40x1x8x128xf32, #tpu.memory_space<vmem>>, vector<1x1x8x128xf32>
    %173 = vector.shape_cast %172 : vector<1x1x8x128xf32> to vector<8x128xf32>
    %174 = vector.shape_cast %166 : vector<8x128xf32> to vector<1x1x8x128xf32>
    tpu.vector_store %arg3[%c25, %171, %c0_54, %c0_55], %174 {strides = array<i32>} : memref<40x1x8x128xf32, #tpu.memory_space<vmem>>, vector<1x1x8x128xf32>,
    %cst_56 = arith.constant -0.334523261 : f32
    %175 = vector.broadcast %cst_56 : f32 to vector<8x128xf32>
    %cst_57 = arith.constant 2.34166288 : f32
    %176 = vector.broadcast %cst_57 : f32 to vector<8x128xf32>
    %177 = arith.mulf %32, %176 : vector<8x128xf32>
    %178 = arith.addf %175, %177 : vector<8x128xf32>
    %179 = arith.mulf %178, %20 : vector<8x128xf32>
    %180 = arith.mulf %41, %179 : vector<8x128xf32>
    %181 = arith.mulf %44, %179 : vector<8x128xf32>
    %c7 = arith.constant 7 : index
    %182 = arith.index_cast %c0_i32 : i32 to index
    %c0_58 = arith.constant 0 : index
    %c0_59 = arith.constant 0 : index
    %183 = vector.load %arg3[%c7, %182, %c0_58, %c0_59] : memref<40x1x8x128xf32, #tpu.memory_space<vmem>>, vector<1x1x8x128xf32>
    %184 = vector.shape_cast %183 : vector<1x1x8x128xf32> to vector<8x128xf32>
    %185 = vector.shape_cast %180 : vector<8x128xf32> to vector<1x1x8x128xf32>
    tpu.vector_store %arg3[%c7, %182, %c0_58, %c0_59], %185 {strides = array<i32>} : memref<40x1x8x128xf32, #tpu.memory_space<vmem>>, vector<1x1x8x128xf32>,
    %c26 = arith.constant 26 : index
    %186 = arith.index_cast %c0_i32 : i32 to index
    %c0_60 = arith.constant 0 : index
    %c0_61 = arith.constant 0 : index
    %187 = vector.load %arg3[%c26, %186, %c0_60, %c0_61] : memref<40x1x8x128xf32, #tpu.memory_space<vmem>>, vector<1x1x8x128xf32>
    %188 = vector.shape_cast %187 : vector<1x1x8x128xf32> to vector<8x128xf32>
    %189 = vector.shape_cast %181 : vector<8x128xf32> to vector<1x1x8x128xf32>
    tpu.vector_store %arg3[%c26, %186, %c0_60, %c0_61], %189 {strides = array<i32>} : memref<40x1x8x128xf32, #tpu.memory_space<vmem>>, vector<1x1x8x128xf32>,
    %cst_62 = arith.constant -1.25167143 : f32
    %190 = vector.broadcast %cst_62 : f32 to vector<8x128xf32>
    %191 = arith.mulf %8, %190 : vector<8x128xf32>
    %192 = arith.mulf %191, %20 : vector<8x128xf32>
    %193 = arith.mulf %47, %192 : vector<8x128xf32>
    %194 = arith.mulf %50, %192 : vector<8x128xf32>
    %c8 = arith.constant 8 : index
    %195 = arith.index_cast %c0_i32 : i32 to index
    %c0_63 = arith.constant 0 : index
    %c0_64 = arith.constant 0 : index
    %196 = vector.load %arg3[%c8, %195, %c0_63, %c0_64] : memref<40x1x8x128xf32, #tpu.memory_space<vmem>>, vector<1x1x8x128xf32>
    %197 = vector.shape_cast %196 : vector<1x1x8x128xf32> to vector<8x128xf32>
    %198 = vector.shape_cast %193 : vector<8x128xf32> to vector<1x1x8x128xf32>
    tpu.vector_store %arg3[%c8, %195, %c0_63, %c0_64], %198 {strides = array<i32>} : memref<40x1x8x128xf32, #tpu.memory_space<vmem>>, vector<1x1x8x128xf32>,
    %c27 = arith.constant 27 : index
    %199 = arith.index_cast %c0_i32 : i32 to index
    %c0_65 = arith.constant 0 : index
    %c0_66 = arith.constant 0 : index
    %200 = vector.load %arg3[%c27, %199, %c0_65, %c0_66] : memref<40x1x8x128xf32, #tpu.memory_space<vmem>>, vector<1x1x8x128xf32>
    %201 = vector.shape_cast %200 : vector<1x1x8x128xf32> to vector<8x128xf32>
    %202 = vector.shape_cast %194 : vector<8x128xf32> to vector<1x1x8x128xf32>
    tpu.vector_store %arg3[%c27, %199, %c0_65, %c0_66], %202 {strides = array<i32>} : memref<40x1x8x128xf32, #tpu.memory_space<vmem>>, vector<1x1x8x128xf32>,
    %cst_67 = arith.constant 0.442532688 : f32
    %203 = vector.broadcast %cst_67 : f32 to vector<8x128xf32>
    %204 = arith.mulf %203, %20 : vector<8x128xf32>
    %205 = arith.mulf %53, %204 : vector<8x128xf32>
    %206 = arith.mulf %56, %204 : vector<8x128xf32>
    %c9 = arith.constant 9 : index
    %207 = arith.index_cast %c0_i32 : i32 to index
    %c0_68 = arith.constant 0 : index
    %c0_69 = arith.constant 0 : index
    %208 = vector.load %arg3[%c9, %207, %c0_68, %c0_69] : memref<40x1x8x128xf32, #tpu.memory_space<vmem>>, vector<1x1x8x128xf32>
    %209 = vector.shape_cast %208 : vector<1x1x8x128xf32> to vector<8x128xf32>
    %210 = vector.shape_cast %205 : vector<8x128xf32> to vector<1x1x8x128xf32>
    tpu.vector_store %arg3[%c9, %207, %c0_68, %c0_69], %210 {strides = array<i32>} : memref<40x1x8x128xf32, #tpu.memory_space<vmem>>, vector<1x1x8x128xf32>,
    %c28 = arith.constant 28 : index
    %211 = arith.index_cast %c0_i32 : i32 to index
    %c0_70 = arith.constant 0 : index
    %c0_71 = arith.constant 0 : index
    %212 = vector.load %arg3[%c28, %211, %c0_70, %c0_71] : memref<40x1x8x128xf32, #tpu.memory_space<vmem>>, vector<1x1x8x128xf32>
    %213 = vector.shape_cast %212 : vector<1x1x8x128xf32> to vector<8x128xf32>
    %214 = vector.shape_cast %206 : vector<8x128xf32> to vector<1x1x8x128xf32>
    tpu.vector_store %arg3[%c28, %211, %c0_70, %c0_71], %214 {strides = array<i32>} : memref<40x1x8x128xf32, #tpu.memory_space<vmem>>, vector<1x1x8x128xf32>,
    %cst_72 = arith.constant 0.318036973 : f32
    %215 = vector.broadcast %cst_72 : f32 to vector<8x128xf32>
    %cst_73 = arith.constant -11.4493313 : f32
    %216 = vector.broadcast %cst_73 : f32 to vector<8x128xf32>
    %217 = arith.mulf %32, %216 : vector<8x128xf32>
    %218 = arith.addf %215, %217 : vector<8x128xf32>
    %cst_74 = arith.constant 62.9713211 : f32
    %219 = vector.broadcast %cst_74 : f32 to vector<8x128xf32>
    %220 = arith.mulf %34, %219 : vector<8x128xf32>
    %221 = arith.addf %218, %220 : vector<8x128xf32>
    %cst_75 = arith.constant -109.150284 : f32
    %222 = vector.broadcast %cst_75 : f32 to vector<8x128xf32>
    %223 = arith.mulf %36, %222 : vector<8x128xf32>
    %224 = arith.addf %221, %223 : vector<8x128xf32>
    %cst_76 = arith.constant 58.4733696 : f32
    %225 = vector.broadcast %cst_76 : f32 to vector<8x128xf32>
    %226 = arith.mulf %38, %225 : vector<8x128xf32>
    %227 = arith.addf %224, %226 : vector<8x128xf32>
    %228 = arith.mulf %227, %23 : vector<8x128xf32>
    %c10 = arith.constant 10 : index
    %229 = arith.index_cast %c0_i32 : i32 to index
    %c0_77 = arith.constant 0 : index
    %c0_78 = arith.constant 0 : index
    %230 = vector.load %arg3[%c10, %229, %c0_77, %c0_78] : memref<40x1x8x128xf32, #tpu.memory_space<vmem>>, vector<1x1x8x128xf32>
    %231 = vector.shape_cast %230 : vector<1x1x8x128xf32> to vector<8x128xf32>
    %232 = vector.shape_cast %228 : vector<8x128xf32> to vector<1x1x8x128xf32>
    tpu.vector_store %arg3[%c10, %229, %c0_77, %c0_78], %232 {strides = array<i32>} : memref<40x1x8x128xf32, #tpu.memory_space<vmem>>, vector<1x1x8x128xf32>,
    %c29 = arith.constant 29 : index
    %233 = arith.index_cast %c0_i32 : i32 to index
    %c0_79 = arith.constant 0 : index
    %c0_80 = arith.constant 0 : index
    %234 = vector.load %arg3[%c29, %233, %c0_79, %c0_80] : memref<40x1x8x128xf32, #tpu.memory_space<vmem>>, vector<1x1x8x128xf32>
    %235 = vector.shape_cast %234 : vector<1x1x8x128xf32> to vector<8x128xf32>
    %236 = vector.shape_cast %81 : vector<8x128xf32> to vector<1x1x8x128xf32>
    tpu.vector_store %arg3[%c29, %233, %c0_79, %c0_80], %236 {strides = array<i32>} : memref<40x1x8x128xf32, #tpu.memory_space<vmem>>, vector<1x1x8x128xf32>,
    %cst_81 = arith.constant 2.69863319 : f32
    %237 = vector.broadcast %cst_81 : f32 to vector<8x128xf32>
    %238 = arith.mulf %8, %237 : vector<8x128xf32>
    %cst_82 = arith.constant -29.6849651 : f32
    %239 = vector.broadcast %cst_82 : f32 to vector<8x128xf32>
    %240 = arith.mulf %33, %239 : vector<8x128xf32>
    %241 = arith.addf %238, %240 : vector<8x128xf32>
    %cst_83 = arith.constant 77.1809082 : f32
    %242 = vector.broadcast %cst_83 : f32 to vector<8x128xf32>
    %243 = arith.mulf %35, %242 : vector<8x128xf32>
    %244 = arith.addf %241, %243 : vector<8x128xf32>
    %cst_84 = arith.constant -55.1292191 : f32
    %245 = vector.broadcast %cst_84 : f32 to vector<8x128xf32>
    %246 = arith.mulf %37, %245 : vector<8x128xf32>
    %247 = arith.addf %244, %246 : vector<8x128xf32>
    %248 = arith.mulf %247, %23 : vector<8x128xf32>
    %249 = arith.mulf %2, %248 : vector<8x128xf32>
    %250 = arith.mulf %31, %248 : vector<8x128xf32>
    %c11 = arith.constant 11 : index
    %251 = arith.index_cast %c0_i32 : i32 to index
    %c0_85 = arith.constant 0 : index
    %c0_86 = arith.constant 0 : index
    %252 = vector.load %arg3[%c11, %251, %c0_85, %c0_86] : memref<40x1x8x128xf32, #tpu.memory_space<vmem>>, vector<1x1x8x128xf32>
    %253 = vector.shape_cast %252 : vector<1x1x8x128xf32> to vector<8x128xf32>
    %254 = vector.shape_cast %249 : vector<8x128xf32> to vector<1x1x8x128xf32>
    tpu.vector_store %arg3[%c11, %251, %c0_85, %c0_86], %254 {strides = array<i32>} : memref<40x1x8x128xf32, #tpu.memory_space<vmem>>, vector<1x1x8x128xf32>,
    %c30 = arith.constant 30 : index
    %255 = arith.index_cast %c0_i32 : i32 to index
    %c0_87 = arith.constant 0 : index
    %c0_88 = arith.constant 0 : index
    %256 = vector.load %arg3[%c30, %255, %c0_87, %c0_88] : memref<40x1x8x128xf32, #tpu.memory_space<vmem>>, vector<1x1x8x128xf32>
    %257 = vector.shape_cast %256 : vector<1x1x8x128xf32> to vector<8x128xf32>
    %258 = vector.shape_cast %250 : vector<8x128xf32> to vector<1x1x8x128xf32>
    tpu.vector_store %arg3[%c30, %255, %c0_87, %c0_88], %258 {strides = array<i32>} : memref<40x1x8x128xf32, #tpu.memory_space<vmem>>, vector<1x1x8x128xf32>,
    %cst_89 = arith.constant -0.32254836 : f32
    %259 = vector.broadcast %cst_89 : f32 to vector<8x128xf32>
    %cst_90 = arith.constant 10.6440954 : f32
    %260 = vector.broadcast %cst_90 : f32 to vector<8x128xf32>
    %261 = arith.mulf %32, %260 : vector<8x128xf32>
    %262 = arith.addf %259, %261 : vector<8x128xf32>
    %cst_91 = arith.constant -46.1244164 : f32
    %263 = vector.broadcast %cst_91 : f32 to vector<8x128xf32>
    %264 = arith.mulf %34, %263 : vector<8x128xf32>
    %265 = arith.addf %262, %264 : vector<8x128xf32>
    %cst_92 = arith.constant 46.1244164 : f32
    %266 = vector.broadcast %cst_92 : f32 to vector<8x128xf32>
    %267 = arith.mulf %36, %266 : vector<8x128xf32>
    %268 = arith.addf %265, %267 : vector<8x128xf32>
    %269 = arith.mulf %268, %23 : vector<8x128xf32>
    %270 = arith.mulf %41, %269 : vector<8x128xf32>
    %271 = arith.mulf %44, %269 : vector<8x128xf32>
    %c12 = arith.constant 12 : index
    %272 = arith.index_cast %c0_i32 : i32 to index
    %c0_93 = arith.constant 0 : index
    %c0_94 = arith.constant 0 : index
    %273 = vector.load %arg3[%c12, %272, %c0_93, %c0_94] : memref<40x1x8x128xf32, #tpu.memory_space<vmem>>, vector<1x1x8x128xf32>
    %274 = vector.shape_cast %273 : vector<1x1x8x128xf32> to vector<8x128xf32>
    %275 = vector.shape_cast %270 : vector<8x128xf32> to vector<1x1x8x128xf32>
    tpu.vector_store %arg3[%c12, %272, %c0_93, %c0_94], %275 {strides = array<i32>} : memref<40x1x8x128xf32, #tpu.memory_space<vmem>>, vector<1x1x8x128xf32>,
    %c31 = arith.constant 31 : index
    %276 = arith.index_cast %c0_i32 : i32 to index
    %c0_95 = arith.constant 0 : index
    %c0_96 = arith.constant 0 : index
    %277 = vector.load %arg3[%c31, %276, %c0_95, %c0_96] : memref<40x1x8x128xf32, #tpu.memory_space<vmem>>, vector<1x1x8x128xf32>
    %278 = vector.shape_cast %277 : vector<1x1x8x128xf32> to vector<8x128xf32>
    %279 = vector.shape_cast %271 : vector<8x128xf32> to vector<1x1x8x128xf32>
    tpu.vector_store %arg3[%c31, %276, %c0_95, %c0_96], %279 {strides = array<i32>} : memref<40x1x8x128xf32, #tpu.memory_space<vmem>>, vector<1x1x8x128xf32>,
    %cst_97 = arith.constant -2.62039518 : f32
    %280 = vector.broadcast %cst_97 : f32 to vector<8x128xf32>
    %281 = arith.mulf %8, %280 : vector<8x128xf32>
    %cst_98 = arith.constant 22.7100925 : f32
    %282 = vector.broadcast %cst_98 : f32 to vector<8x128xf32>
    %283 = arith.mulf %33, %282 : vector<8x128xf32>
    %284 = arith.addf %281, %283 : vector<8x128xf32>
    %cst_99 = arith.constant -34.0651398 : f32
    %285 = vector.broadcast %cst_99 : f32 to vector<8x128xf32>
    %286 = arith.mulf %35, %285 : vector<8x128xf32>
    %287 = arith.addf %284, %286 : vector<8x128xf32>
    %288 = arith.mulf %287, %23 : vector<8x128xf32>
    %289 = arith.mulf %47, %288 : vector<8x128xf32>
    %290 = arith.mulf %50, %288 : vector<8x128xf32>
    %c13 = arith.constant 13 : index
    %291 = arith.index_cast %c0_i32 : i32 to index
    %c0_100 = arith.constant 0 : index
    %c0_101 = arith.constant 0 : index
    %292 = vector.load %arg3[%c13, %291, %c0_100, %c0_101] : memref<40x1x8x128xf32, #tpu.memory_space<vmem>>, vector<1x1x8x128xf32>
    %293 = vector.shape_cast %292 : vector<1x1x8x128xf32> to vector<8x128xf32>
    %294 = vector.shape_cast %289 : vector<8x128xf32> to vector<1x1x8x128xf32>
    tpu.vector_store %arg3[%c13, %291, %c0_100, %c0_101], %294 {strides = array<i32>} : memref<40x1x8x128xf32, #tpu.memory_space<vmem>>, vector<1x1x8x128xf32>,
    %c32 = arith.constant 32 : index
    %295 = arith.index_cast %c0_i32 : i32 to index
    %c0_102 = arith.constant 0 : index
    %c0_103 = arith.constant 0 : index
    %296 = vector.load %arg3[%c32, %295, %c0_102, %c0_103] : memref<40x1x8x128xf32, #tpu.memory_space<vmem>>, vector<1x1x8x128xf32>
    %297 = vector.shape_cast %296 : vector<1x1x8x128xf32> to vector<8x128xf32>
    %298 = vector.shape_cast %290 : vector<8x128xf32> to vector<1x1x8x128xf32>
    tpu.vector_store %arg3[%c32, %295, %c0_102, %c0_103], %298 {strides = array<i32>} : memref<40x1x8x128xf32, #tpu.memory_space<vmem>>, vector<1x1x8x128xf32>,
    %cst_104 = arith.constant 0.338291556 : f32
    %299 = vector.broadcast %cst_104 : f32 to vector<8x128xf32>
    %cst_105 = arith.constant -8.79558086 : f32
    %300 = vector.broadcast %cst_105 : f32 to vector<8x128xf32>
    %301 = arith.mulf %32, %300 : vector<8x128xf32>
    %302 = arith.addf %299, %301 : vector<8x128xf32>
    %cst_106 = arith.constant 21.9889526 : f32
    %303 = vector.broadcast %cst_106 : f32 to vector<8x128xf32>
    %304 = arith.mulf %34, %303 : vector<8x128xf32>
    %305 = arith.addf %302, %304 : vector<8x128xf32>
    %306 = arith.mulf %305, %23 : vector<8x128xf32>
    %307 = arith.mulf %53, %306 : vector<8x128xf32>
    %308 = arith.mulf %56, %306 : vector<8x128xf32>
    %c14 = arith.constant 14 : index
    %309 = arith.index_cast %c0_i32 : i32 to index
    %c0_107 = arith.constant 0 : index
    %c0_108 = arith.constant 0 : index
    %310 = vector.load %arg3[%c14, %309, %c0_107, %c0_108] : memref<40x1x8x128xf32, #tpu.memory_space<vmem>>, vector<1x1x8x128xf32>
    %311 = vector.shape_cast %310 : vector<1x1x8x128xf32> to vector<8x128xf32>
    %312 = vector.shape_cast %307 : vector<8x128xf32> to vector<1x1x8x128xf32>
    tpu.vector_store %arg3[%c14, %309, %c0_107, %c0_108], %312 {strides = array<i32>} : memref<40x1x8x128xf32, #tpu.memory_space<vmem>>, vector<1x1x8x128xf32>,
    %c33 = arith.constant 33 : index
    %313 = arith.index_cast %c0_i32 : i32 to index
    %c0_109 = arith.constant 0 : index
    %c0_110 = arith.constant 0 : index
    %314 = vector.load %arg3[%c33, %313, %c0_109, %c0_110] : memref<40x1x8x128xf32, #tpu.memory_space<vmem>>, vector<1x1x8x128xf32>
    %315 = vector.shape_cast %314 : vector<1x1x8x128xf32> to vector<8x128xf32>
    %316 = vector.shape_cast %308 : vector<8x128xf32> to vector<1x1x8x128xf32>
    tpu.vector_store %arg3[%c33, %313, %c0_109, %c0_110], %316 {strides = array<i32>} : memref<40x1x8x128xf32, #tpu.memory_space<vmem>>, vector<1x1x8x128xf32>,
    %cst_111 = arith.constant 2.43945527 : f32
    %317 = vector.broadcast %cst_111 : f32 to vector<8x128xf32>
    %318 = arith.mulf %8, %317 : vector<8x128xf32>
    %cst_112 = arith.constant -12.1972761 : f32
    %319 = vector.broadcast %cst_112 : f32 to vector<8x128xf32>
    %320 = arith.mulf %33, %319 : vector<8x128xf32>
    %321 = arith.addf %318, %320 : vector<8x128xf32>
    %322 = arith.mulf %321, %23 : vector<8x128xf32>
    %323 = arith.mulf %59, %322 : vector<8x128xf32>
    %324 = arith.mulf %62, %322 : vector<8x128xf32>
    %c15 = arith.constant 15 : index
    %325 = arith.index_cast %c0_i32 : i32 to index
    %c0_113 = arith.constant 0 : index
    %c0_114 = arith.constant 0 : index
    %326 = vector.load %arg3[%c15, %325, %c0_113, %c0_114] : memref<40x1x8x128xf32, #tpu.memory_space<vmem>>, vector<1x1x8x128xf32>
    %327 = vector.shape_cast %326 : vector<1x1x8x128xf32> to vector<8x128xf32>
    %328 = vector.shape_cast %323 : vector<8x128xf32> to vector<1x1x8x128xf32>
    tpu.vector_store %arg3[%c15, %325, %c0_113, %c0_114], %328 {strides = array<i32>} : memref<40x1x8x128xf32, #tpu.memory_space<vmem>>, vector<1x1x8x128xf32>,
    %c34 = arith.constant 34 : index
    %329 = arith.index_cast %c0_i32 : i32 to index
    %c0_115 = arith.constant 0 : index
    %c0_116 = arith.constant 0 : index
    %330 = vector.load %arg3[%c34, %329, %c0_115, %c0_116] : memref<40x1x8x128xf32, #tpu.memory_space<vmem>>, vector<1x1x8x128xf32>
    %331 = vector.shape_cast %330 : vector<1x1x8x128xf32> to vector<8x128xf32>
    %332 = vector.shape_cast %324 : vector<8x128xf32> to vector<1x1x8x128xf32>
    tpu.vector_store %arg3[%c34, %329, %c0_115, %c0_116], %332 {strides = array<i32>} : memref<40x1x8x128xf32, #tpu.memory_space<vmem>>, vector<1x1x8x128xf32>,
    %cst_117 = arith.constant -0.376416117 : f32
    %333 = vector.broadcast %cst_117 : f32 to vector<8x128xf32>
    %cst_118 = arith.constant 5.64624166 : f32
    %334 = vector.broadcast %cst_118 : f32 to vector<8x128xf32>
    %335 = arith.mulf %32, %334 : vector<8x128xf32>
    %336 = arith.addf %333, %335 : vector<8x128xf32>
    %337 = arith.mulf %336, %23 : vector<8x128xf32>
    %338 = arith.mulf %65, %337 : vector<8x128xf32>
    %339 = arith.mulf %68, %337 : vector<8x128xf32>
    %c16 = arith.constant 16 : index
    %340 = arith.index_cast %c0_i32 : i32 to index
    %c0_119 = arith.constant 0 : index
    %c0_120 = arith.constant 0 : index
    %341 = vector.load %arg3[%c16, %340, %c0_119, %c0_120] : memref<40x1x8x128xf32, #tpu.memory_space<vmem>>, vector<1x1x8x128xf32>
    %342 = vector.shape_cast %341 : vector<1x1x8x128xf32> to vector<8x128xf32>
    %343 = vector.shape_cast %338 : vector<8x128xf32> to vector<1x1x8x128xf32>
    tpu.vector_store %arg3[%c16, %340, %c0_119, %c0_120], %343 {strides = array<i32>} : memref<40x1x8x128xf32, #tpu.memory_space<vmem>>, vector<1x1x8x128xf32>,
    %c35 = arith.constant 35 : index
    %344 = arith.index_cast %c0_i32 : i32 to index
    %c0_121 = arith.constant 0 : index
    %c0_122 = arith.constant 0 : index
    %345 = vector.load %arg3[%c35, %344, %c0_121, %c0_122] : memref<40x1x8x128xf32, #tpu.memory_space<vmem>>, vector<1x1x8x128xf32>
    %346 = vector.shape_cast %345 : vector<1x1x8x128xf32> to vector<8x128xf32>
    %347 = vector.shape_cast %339 : vector<8x128xf32> to vector<1x1x8x128xf32>
    tpu.vector_store %arg3[%c35, %344, %c0_121, %c0_122], %347 {strides = array<i32>} : memref<40x1x8x128xf32, #tpu.memory_space<vmem>>, vector<1x1x8x128xf32>,
    %cst_123 = arith.constant -2.06171584 : f32
    %348 = vector.broadcast %cst_123 : f32 to vector<8x128xf32>
    %349 = arith.mulf %8, %348 : vector<8x128xf32>
    %350 = arith.mulf %349, %23 : vector<8x128xf32>
    %351 = arith.mulf %71, %350 : vector<8x128xf32>
    %352 = arith.mulf %74, %350 : vector<8x128xf32>
    %c17 = arith.constant 17 : index
    %353 = arith.index_cast %c0_i32 : i32 to index
    %c0_124 = arith.constant 0 : index
    %c0_125 = arith.constant 0 : index
    %354 = vector.load %arg3[%c17, %353, %c0_124, %c0_125] : memref<40x1x8x128xf32, #tpu.memory_space<vmem>>, vector<1x1x8x128xf32>
    %355 = vector.shape_cast %354 : vector<1x1x8x128xf32> to vector<8x128xf32>
    %356 = vector.shape_cast %351 : vector<8x128xf32> to vector<1x1x8x128xf32>
    tpu.vector_store %arg3[%c17, %353, %c0_124, %c0_125], %356 {strides = array<i32>} : memref<40x1x8x128xf32, #tpu.memory_space<vmem>>, vector<1x1x8x128xf32>,
    %c36 = arith.constant 36 : index
    %357 = arith.index_cast %c0_i32 : i32 to index
    %c0_126 = arith.constant 0 : index
    %c0_127 = arith.constant 0 : index
    %358 = vector.load %arg3[%c36, %357, %c0_126, %c0_127] : memref<40x1x8x128xf32, #tpu.memory_space<vmem>>, vector<1x1x8x128xf32>
    %359 = vector.shape_cast %358 : vector<1x1x8x128xf32> to vector<8x128xf32>
    %360 = vector.shape_cast %352 : vector<8x128xf32> to vector<1x1x8x128xf32>
    tpu.vector_store %arg3[%c36, %357, %c0_126, %c0_127], %360 {strides = array<i32>} : memref<40x1x8x128xf32, #tpu.memory_space<vmem>>, vector<1x1x8x128xf32>,
    %cst_128 = arith.constant 0.51542896 : f32
    %361 = vector.broadcast %cst_128 : f32 to vector<8x128xf32>
    %362 = arith.mulf %361, %23 : vector<8x128xf32>
    %363 = arith.mulf %77, %362 : vector<8x128xf32>
    %364 = arith.mulf %80, %362 : vector<8x128xf32>
    %c18 = arith.constant 18 : index
    %365 = arith.index_cast %c0_i32 : i32 to index
    %c0_129 = arith.constant 0 : index
    %c0_130 = arith.constant 0 : index
    %366 = vector.load %arg3[%c18, %365, %c0_129, %c0_130] : memref<40x1x8x128xf32, #tpu.memory_space<vmem>>, vector<1x1x8x128xf32>
    %367 = vector.shape_cast %366 : vector<1x1x8x128xf32> to vector<8x128xf32>
    %368 = vector.shape_cast %363 : vector<8x128xf32> to vector<1x1x8x128xf32>
    tpu.vector_store %arg3[%c18, %365, %c0_129, %c0_130], %368 {strides = array<i32>} : memref<40x1x8x128xf32, #tpu.memory_space<vmem>>, vector<1x1x8x128xf32>,
    %c37 = arith.constant 37 : index
    %369 = arith.index_cast %c0_i32 : i32 to index
    %c0_131 = arith.constant 0 : index
    %c0_132 = arith.constant 0 : index
    %370 = vector.load %arg3[%c37, %369, %c0_131, %c0_132] : memref<40x1x8x128xf32, #tpu.memory_space<vmem>>, vector<1x1x8x128xf32>
    %371 = vector.shape_cast %370 : vector<1x1x8x128xf32> to vector<8x128xf32>
    %372 = vector.shape_cast %364 : vector<8x128xf32> to vector<1x1x8x128xf32>
    tpu.vector_store %arg3[%c37, %369, %c0_131, %c0_132], %372 {strides = array<i32>} : memref<40x1x8x128xf32, #tpu.memory_space<vmem>>, vector<1x1x8x128xf32>,
    %c38 = arith.constant 38 : index
    %373 = arith.index_cast %c0_i32 : i32 to index
    %c0_133 = arith.constant 0 : index
    %c0_134 = arith.constant 0 : index
    %374 = vector.load %arg3[%c38, %373, %c0_133, %c0_134] : memref<40x1x8x128xf32, #tpu.memory_space<vmem>>, vector<1x1x8x128xf32>
    %375 = vector.shape_cast %374 : vector<1x1x8x128xf32> to vector<8x128xf32>
    %376 = vector.shape_cast %81 : vector<8x128xf32> to vector<1x1x8x128xf32>
    tpu.vector_store %arg3[%c38, %373, %c0_133, %c0_134], %376 {strides = array<i32>} : memref<40x1x8x128xf32, #tpu.memory_space<vmem>>, vector<1x1x8x128xf32>,
    %c39 = arith.constant 39 : index
    %377 = arith.index_cast %c0_i32 : i32 to index
    %c0_135 = arith.constant 0 : index
    %c0_136 = arith.constant 0 : index
    %378 = vector.load %arg3[%c39, %377, %c0_135, %c0_136] : memref<40x1x8x128xf32, #tpu.memory_space<vmem>>, vector<1x1x8x128xf32>
    %379 = vector.shape_cast %378 : vector<1x1x8x128xf32> to vector<8x128xf32>
    %380 = vector.shape_cast %81 : vector<8x128xf32> to vector<1x1x8x128xf32>
    tpu.vector_store %arg3[%c39, %377, %c0_135, %c0_136], %380 {strides = array<i32>} : memref<40x1x8x128xf32, #tpu.memory_space<vmem>>, vector<1x1x8x128xf32>,
    %c1_i32 = arith.constant 1 : i32
    return
  }
  func.func @transform_0(%arg0: i32) -> (i32, i32, i32, i32) {
    %c0_i32 = arith.constant 0 : i32
    %c0_i32_0 = arith.constant 0 : i32
    %c0_i32_1 = arith.constant 0 : i32
    %c0_i32_2 = arith.constant 0 : i32
    return %c0_i32, %arg0, %c0_i32_0, %c0_i32_1 : i32, i32, i32, i32
  }
  func.func @transform_1(%arg0: i32) -> (i32, i32, i32) {
    %c0_i32 = arith.constant 0 : i32
    %c0_i32_0 = arith.constant 0 : i32
    %c0_i32_1 = arith.constant 0 : i32
    return %arg0, %c0_i32, %c0_i32_0 : i32, i32, i32
  }
  func.func @transform_2(%arg0: i32) -> (i32, i32, i32, i32) {
    %c0_i32 = arith.constant 0 : i32
    %c0_i32_0 = arith.constant 0 : i32
    %c0_i32_1 = arith.constant 0 : i32
    %c0_i32_2 = arith.constant 0 : i32
    return %c0_i32, %arg0, %c0_i32_0, %c0_i32_1 : i32, i32, i32, i32
  }
}

</mosaic_0001>

<llo_original>
// kernel: tpu_custom_call.1
$region0: #{tpu_custom_call.1}
  #allocation0 [shape = 'u32[]', space=smem, size = 0x4, offset = 0x4, fixed_abs, tag = 'smem constant byte address 0x4 - core index']
  #allocation1 [shape = 'u32[144,128]{1,0:T(1,128)}', space=vmem, size = 0x12000, scoped, tag = 'internal scratch']
  %s0 = inlined_call_operand.hbm [shape: f32[3,1,8,128], index: 0, kind: input, shape index: {}]
  %s1 = inlined_call_operand.hbm [shape: f32[1,8,128], index: 1, kind: input, shape index: {}]
  %s2 = inlined_call_operand.hbm [shape: f32[40,1,8,128], index: 2, kind: output, shape index: {}]
  %s3 = sld [smem:[#allocation0]]
  $region26: #{tpu_custom_call.1} parent=0
    _
  %s5 = ssub.s32 1, %s3
  %s6 = scalar_select 0, %s5, %s3
  $region1: #{tpu_custom_call.1} parent=0
    #allocation2 [shape = 'u8[12288]{0}', space=vmem, size = 0x3000, scoped, tag = 'input window, operand 0, single buffered']
    #allocation3 [shape = 's32[1]{0}', space=sflag, size = 0x4, scoped, tag = 'scoped memory for tpu_custom_call.1']
    #allocation4 [shape = 's32[1]{0}', space=sflag, size = 0x4, scoped, tag = 'scoped memory for tpu_custom_call.1']
    #allocation5 [shape = 'u8[4096]{0}', space=vmem, size = 0x1000, scoped, tag = 'input window, operand 1, single buffered']
    #allocation6 [shape = 's32[1]{0}', space=sflag, size = 0x4, scoped, tag = 'scoped memory for tpu_custom_call.1']
    #allocation7 [shape = 'u8[163840]{0}', space=vmem, size = 0x28000, scoped, tag = 'output window, operand 0, single buffered']
    %7 = vsyncpa [#allocation3], 0
    %8 = vsyncpa [#allocation6], 0
    %9 = vsyncpa [#allocation4], 0
    // Predicated region
    $region2: #{tpu_custom_call.1} parent=1 // pred_check
      _
    $region3: #{tpu_custom_call.1} parent=1 // pred_check_branch
      %11 = sbr.rel (0) target = $region5
    $region4: #{tpu_custom_call.1} parent=1 // pred_region
      %s13 = ssub.s32 384, 384
      %14 = vsyncadd [#allocation3], %s13
      %s15 = sshll.u32 [#allocation2], 4
      %s16 = int_to_ptr.vmem [resolvable:$true] %s15
      %21 = dma.hbm_to_vmem [thread:$0]  %s0, 384, %s16, [#allocation3], 128, 128, 8
    $region5: #{tpu_custom_call.1} parent=1 // pred_fallthru
      _
    // Predicated region
    $region6: #{tpu_custom_call.1} parent=1 // pred_check
      _
    $region7: #{tpu_custom_call.1} parent=1 // pred_check_branch
      %23 = sbr.rel (0) target = $region9
    $region8: #{tpu_custom_call.1} parent=1 // pred_region
      %s25 = ssub.s32 128, 128
      %26 = vsyncadd [#allocation6], %s25
      %s28 = sshll.u32 [#allocation5], 4
      %s29 = int_to_ptr.vmem [resolvable:$true] %s28
      %31 = dma.hbm_to_vmem [thread:$0]  %s1, 128, %s29, [#allocation6]
    $region9: #{tpu_custom_call.1} parent=1 // pred_fallthru
      _
    // Predicated region
    $region10: #{tpu_custom_call.1} parent=1 // pred_check
      _
    $region11: #{tpu_custom_call.1} parent=1 // pred_check_branch
      %33 = sbr.rel (0) target = $region13
    $region12: #{tpu_custom_call.1} parent=1 // pred_region
      %34 = dma.done [#allocation3], 384
    $region13: #{tpu_custom_call.1} parent=1 // pred_fallthru
      _
    // Predicated region
    $region14: #{tpu_custom_call.1} parent=1 // pred_check
      _
    $region15: #{tpu_custom_call.1} parent=1 // pred_check_branch
      %36 = sbr.rel (0) target = $region17
    $region16: #{tpu_custom_call.1} parent=1 // pred_region
      %37 = dma.done [#allocation6], 128
    $region17: #{tpu_custom_call.1} parent=1 // pred_fallthru
      _
    %v38 = vld [vmem:[#allocation2] sm:$0xff]
    %s39 = scalar_lea.vmem [#allocation2], 8
    %v40 = vld [vmem:[%s39] sm:$0xff]
    %s41 = scalar_lea.vmem [#allocation2], 16
    %v42 = vld [vmem:[%s41] sm:$0xff]
    %v43 = vld [vmem:[#allocation5] sm:$0xff]
    %v44 = vmul.f32 %v43, -1.0
    %v45 = vmul.f32 %v44, 1.442695
    %v46 = vpow.pop %v45
    %v47 = vmul.f32 %v43, -3.0
    %v48 = vmul.f32 %v47, 1.442695
    %v49 = vpow.pop %v48
    %v50 = vmul.f32 %v43, -10.0
    %v51 = vmul.f32 %v50, 1.442695
    %v52 = vpow.pop %v51
    %v53 = vmul.f32 %v43, -36.0
    %v54 = vmul.f32 %v53, 1.442695
    %v55 = vpow.pop %v54
    %vm56 = vcmp.eq.f32.partialorder %v38, 0.0
    %vm57 = vcmp.eq.f32.partialorder %v40, 0.0
    %vm58 = vmand %vm56, %vm57
    %v59 = vsel %vm58, 1, 0
    %v60 = vcvt.s32.f32 %v59
    %v61 = vadd.f32 %v40, %v60
    %v62 = vmul.f32 %v42, %v42
    %v63 = vmul.f32 %v62, %v42
    %v64 = vmul.f32 %v63, %v42
    %v65 = vmul.f32 %v64, %v42
    %v66 = vmul.f32 %v65, %v42
    %v67 = vmul.f32 %v66, %v42
    %v68 = vmul.f32 %v67, %v42
    %v69 = vmul.f32 %v38, %v38
    %v70 = vmul.f32 %v61, %v61
    %v71 = vsub.f32 %v69, %v70
    %v72 = vmul.f32 %v38, %v61
    %v73 = vadd.f32 %v72, %v72
    %v74 = vmul.f32 %v71, %v38
    %v75 = vmul.f32 %v73, %v61
    %v76 = vsub.f32 %v74, %v75
    %v77 = vmul.f32 %v71, %v61
    %v78 = vmul.f32 %v73, %v38
    %v79 = vadd.f32 %v77, %v78
    %v80 = vmul.f32 %v76, %v38
    %v81 = vmul.f32 %v79, %v61
    %v82 = vsub.f32 %v80, %v81
    %v83 = vmul.f32 %v76, %v61
    %v84 = vmul.f32 %v79, %v38
    %v85 = vadd.f32 %v83, %v84
    %v86 = vmul.f32 %v82, %v38
    %v87 = vmul.f32 %v85, %v61
    %v88 = vsub.f32 %v86, %v87
    %v89 = vmul.f32 %v82, %v61
    %v90 = vmul.f32 %v85, %v38
    %v91 = vadd.f32 %v89, %v90
    %v92 = vmul.f32 %v88, %v38
    %v93 = vmul.f32 %v91, %v61
    %v94 = vsub.f32 %v92, %v93
    %v95 = vmul.f32 %v88, %v61
    %v96 = vmul.f32 %v91, %v38
    %v97 = vadd.f32 %v95, %v96
    %v98 = vmul.f32 %v94, %v38
    %v99 = vmul.f32 %v97, %v61
    %v100 = vsub.f32 %v98, %v99
    %v101 = vmul.f32 %v94, %v61
    %v102 = vmul.f32 %v97, %v38
    %v103 = vadd.f32 %v101, %v102
    %v104 = vmul.f32 %v100, %v38
    %v105 = vmul.f32 %v103, %v61
    %v106 = vsub.f32 %v104, %v105
    %v107 = vmul.f32 %v100, %v61
    %v108 = vmul.f32 %v103, %v38
    %v109 = vadd.f32 %v107, %v108
    %v110 = vmul.f32 %v42, 0.48860252
    %v111 = vmul.f32 %v110, %v46
    %112 = vst [vmem:[#allocation7] sm:$0xff] %v111
    %s113 = scalar_lea.vmem [#allocation7], 152
    %114 = vst [vmem:[%s113] sm:$0xff] 0.0
    %v115 = vmul.f32 %v46, -0.34549415
    %v116 = vmul.f32 %v38, %v115
    %v117 = vmul.f32 %v61, %v115
    %s118 = scalar_lea.vmem [#allocation7], 8
    %119 = vst [vmem:[%s118] sm:$0xff] %v116
    %s120 = scalar_lea.vmem [#allocation7], 160
    %121 = vst [vmem:[%s120] sm:$0xff] %v117
    %v122 = vmul.f32 %v62, 0.9461747
    %v123 = vadd.f32 %v122, -0.31539157
    %v124 = vmul.f32 %v123, %v49
    %s125 = scalar_lea.vmem [#allocation7], 16
    %126 = vst [vmem:[%s125] sm:$0xff] %v124
    %s127 = scalar_lea.vmem [#allocation7], 168
    %128 = vst [vmem:[%s127] sm:$0xff] 0.0
    %v129 = vmul.f32 %v42, -0.7725484
    %v130 = vmul.f32 %v129, %v49
    %v131 = vmul.f32 %v38, %v130
    %v132 = vmul.f32 %v61, %v130
    %s133 = scalar_lea.vmem [#allocation7], 24
    %134 = vst [vmem:[%s133] sm:$0xff] %v131
    %s135 = scalar_lea.vmem [#allocation7], 176
    %136 = vst [vmem:[%s135] sm:$0xff] %v132
    %v137 = vmul.f32 %v49, 0.3862742
    %v138 = vmul.f32 %v71, %v137
    %v139 = vmul.f32 %v73, %v137
    %s140 = scalar_lea.vmem [#allocation7], 32
    %141 = vst [vmem:[%s140] sm:$0xff] %v138
    %s142 = scalar_lea.vmem [#allocation7], 184
    %143 = vst [vmem:[%s142] sm:$0xff] %v139
    %v144 = vmul.f32 %v62, -3.1735663
    %v145 = vadd.f32 %v144, 0.31735665
    %v146 = vmul.f32 %v64, 3.7024941
    %v147 = vadd.f32 %v145, %v146
    %v148 = vmul.f32 %v147, %v52
    %s149 = scalar_lea.vmem [#allocation7], 40
    %150 = vst [vmem:[%s149] sm:$0xff] %v148
    %s151 = scalar_lea.vmem [#allocation7], 192
    %152 = vst [vmem:[%s151] sm:$0xff] 0.0
    %v153 = vmul.f32 %v42, 1.419262
    %v154 = vmul.f32 %v63, -3.3116114
    %v155 = vadd.f32 %v153, %v154
    %v156 = vmul.f32 %v155, %v52
    %v157 = vmul.f32 %v38, %v156
    %v158 = vmul.f32 %v61, %v156
    %s159 = scalar_lea.vmem [#allocation7], 48
    %160 = vst [vmem:[%s159] sm:$0xff] %v157
    %s161 = scalar_lea.vmem [#allocation7], 200
    %162 = vst [vmem:[%s161] sm:$0xff] %v158
    %v163 = vmul.f32 %v62, 2.341663
    %v164 = vadd.f32 %v163, -0.33452326
    %v165 = vmul.f32 %v164, %v52
    %v166 = vmul.f32 %v71, %v165
    %v167 = vmul.f32 %v73, %v165
    %s168 = scalar_lea.vmem [#allocation7], 56
    %169 = vst [vmem:[%s168] sm:$0xff] %v166
    %s170 = scalar_lea.vmem [#allocation7], 208
    %171 = vst [vmem:[%s170] sm:$0xff] %v167
    %v172 = vmul.f32 %v42, -1.2516714
    %v173 = vmul.f32 %v172, %v52
    %v174 = vmul.f32 %v76, %v173
    %v175 = vmul.f32 %v79, %v173
    %s176 = scalar_lea.vmem [#allocation7], 64
    %177 = vst [vmem:[%s176] sm:$0xff] %v174
    %s178 = scalar_lea.vmem [#allocation7], 216
    %179 = vst [vmem:[%s178] sm:$0xff] %v175
    %v180 = vmul.f32 %v52, 0.4425327
    %v181 = vmul.f32 %v82, %v180
    %v182 = vmul.f32 %v85, %v180
    %s183 = scalar_lea.vmem [#allocation7], 72
    %184 = vst [vmem:[%s183] sm:$0xff] %v181
    %s185 = scalar_lea.vmem [#allocation7], 224
    %186 = vst [vmem:[%s185] sm:$0xff] %v182
    %v187 = vmul.f32 %v62, -11.449331
    %v188 = vadd.f32 %v187, 0.31803697
    %v189 = vmul.f32 %v64, 62.97132
    %v190 = vadd.f32 %v188, %v189
    %v191 = vmul.f32 %v66, -109.15028
    %v192 = vadd.f32 %v190, %v191
    %v193 = vmul.f32 %v68, 58.47337
    %v194 = vadd.f32 %v192, %v193
    %v195 = vmul.f32 %v194, %v55
    %s196 = scalar_lea.vmem [#allocation7], 80
    %197 = vst [vmem:[%s196] sm:$0xff] %v195
    %s198 = scalar_lea.vmem [#allocation7], 232
    %199 = vst [vmem:[%s198] sm:$0xff] 0.0
    %v200 = vmul.f32 %v42, 2.6986332
    %v201 = vmul.f32 %v63, -29.684965
    %v202 = vadd.f32 %v200, %v201
    %v203 = vmul.f32 %v65, 77.18091
    %v204 = vadd.f32 %v202, %v203
    %v205 = vmul.f32 %v67, -55.12922
    %v206 = vadd.f32 %v204, %v205
    %v207 = vmul.f32 %v206, %v55
    %v208 = vmul.f32 %v38, %v207
    %v209 = vmul.f32 %v61, %v207
    %s210 = scalar_lea.vmem [#allocation7], 88
    %211 = vst [vmem:[%s210] sm:$0xff] %v208
    %s212 = scalar_lea.vmem [#allocation7], 240
    %213 = vst [vmem:[%s212] sm:$0xff] %v209
    %v214 = vmul.f32 %v62, 10.644095
    %v215 = vadd.f32 %v214, -0.32254836
    %v216 = vmul.f32 %v64, -46.124416
    %v217 = vadd.f32 %v215, %v216
    %v218 = vmul.f32 %v66, 46.124416
    %v219 = vadd.f32 %v217, %v218
    %v220 = vmul.f32 %v219, %v55
    %v221 = vmul.f32 %v71, %v220
    %v222 = vmul.f32 %v73, %v220
    %s223 = scalar_lea.vmem [#allocation7], 96
    %224 = vst [vmem:[%s223] sm:$0xff] %v221
    %s225 = scalar_lea.vmem [#allocation7], 248
    %226 = vst [vmem:[%s225] sm:$0xff] %v222
    %v227 = vmul.f32 %v42, -2.6203952
    %v228 = vmul.f32 %v63, 22.710093
    %v229 = vadd.f32 %v227, %v228
    %v230 = vmul.f32 %v65, -34.06514
    %v231 = vadd.f32 %v229, %v230
    %v232 = vmul.f32 %v231, %v55
    %v233 = vmul.f32 %v76, %v232
    %v234 = vmul.f32 %v79, %v232
    %s235 = scalar_lea.vmem [#allocation7], 104
    %236 = vst [vmem:[%s235] sm:$0xff] %v233
    %s237 = scalar_lea.vmem [#allocation7], 256
    %238 = vst [vmem:[%s237] sm:$0xff] %v234
    %v239 = vmul.f32 %v62, -8.795581
    %v240 = vadd.f32 %v239, 0.33829156
    %v241 = vmul.f32 %v64, 21.988953
    %v242 = vadd.f32 %v240, %v241
    %v243 = vmul.f32 %v242, %v55
    %v244 = vmul.f32 %v82, %v243
    %v245 = vmul.f32 %v85, %v243
    %s246 = scalar_lea.vmem [#allocation7], 112
    %247 = vst [vmem:[%s246] sm:$0xff] %v244
    %s248 = scalar_lea.vmem [#allocation7], 264
    %249 = vst [vmem:[%s248] sm:$0xff] %v245
    %v250 = vmul.f32 %v42, 2.4394553
    %v251 = vmul.f32 %v63, -12.197276
    %v252 = vadd.f32 %v250, %v251
    %v253 = vmul.f32 %v252, %v55
    %v254 = vmul.f32 %v88, %v253
    %v255 = vmul.f32 %v91, %v253
    %s256 = scalar_lea.vmem [#allocation7], 120
    %257 = vst [vmem:[%s256] sm:$0xff] %v254
    %s258 = scalar_lea.vmem [#allocation7], 272
    %259 = vst [vmem:[%s258] sm:$0xff] %v255
    %v260 = vmul.f32 %v62, 5.6462417
    %v261 = vadd.f32 %v260, -0.37641612
    %v262 = vmul.f32 %v261, %v55
    %v263 = vmul.f32 %v94, %v262
    %v264 = vmul.f32 %v97, %v262
    %s265 = scalar_lea.vmem [#allocation7], 128
    %266 = vst [vmem:[%s265] sm:$0xff] %v263
    %s267 = scalar_lea.vmem [#allocation7], 280
    %268 = vst [vmem:[%s267] sm:$0xff] %v264
    %v269 = vmul.f32 %v42, -2.0617158
    %v270 = vmul.f32 %v269, %v55
    %v271 = vmul.f32 %v100, %v270
    %v272 = vmul.f32 %v103, %v270
    %s273 = scalar_lea.vmem [#allocation7], 136
    %274 = vst [vmem:[%s273] sm:$0xff] %v271
    %s275 = scalar_lea.vmem [#allocation7], 288
    %276 = vst [vmem:[%s275] sm:$0xff] %v272
    %v277 = vmul.f32 %v55, 0.51542896
    %v278 = vmul.f32 %v106, %v277
    %v279 = vmul.f32 %v109, %v277
    %s280 = scalar_lea.vmem [#allocation7], 144
    %281 = vst [vmem:[%s280] sm:$0xff] %v278
    %s282 = scalar_lea.vmem [#allocation7], 296
    %283 = vst [vmem:[%s282] sm:$0xff] %v279
    %s284 = scalar_lea.vmem [#allocation7], 304
    %285 = vst [vmem:[%s284] sm:$0xff] 0.0
    %s286 = scalar_lea.vmem [#allocation7], 312
    %287 = vst [vmem:[%s286] sm:$0xff] 0.0
    // Predicated region
    $region18: #{tpu_custom_call.1} parent=1 // pred_check
      _
    $region19: #{tpu_custom_call.1} parent=1 // pred_check_branch
      %289 = sbr.rel (0) target = $region21
    $region20: #{tpu_custom_call.1} parent=1 // pred_region
      %s291 = ssub.s32 5120, 5120
      %292 = vsyncadd [#allocation4], %s291
      %s293 = sshll.u32 [#allocation7], 4
      %s294 = int_to_ptr.vmem [resolvable:$true] %s293
      %299 = dma.vmem_to_hbm [thread:$0]  %s294, 5120, %s2, [#allocation4], 128, 128, 8
    $region21: #{tpu_custom_call.1} parent=1 // pred_fallthru
      _
    // Predicated region
    $region22: #{tpu_custom_call.1} parent=1 // pred_check
      _
    $region23: #{tpu_custom_call.1} parent=1 // pred_check_branch
      %301 = sbr.rel (0) target = $region25
    $region24: #{tpu_custom_call.1} parent=1 // pred_region
      %302 = dma.done [#allocation4], 5120
    $region25: #{tpu_custom_call.1} parent=1 // pred_fallthru
      _
    %303 = vsyncpa [#allocation3], 1
    %304 = vsyncpa [#allocation6], 1
    %305 = vsyncpa [#allocation4], 1

</llo_original>
